<compile_context>
chip_gen: v7x
topology: tpu7x:2x2x1
jax: 0.10.0
libtpu: 0.0.40
codegen_flags: <defaults>
</compile_context>

<pallas_src>
import math

import jax
import jax.numpy as jnp
from jax.experimental import pallas as pl
from jax.experimental.pallas import tpu as pltpu


def _round_up(x, m):
    return (x + m - 1) // m * m


def _pick_tile(n_padded, max_tile=512):
    """Largest power-of-two tile <= max_tile that divides n_padded (n_padded is a
    multiple of 128, so this always terminates at >= 128)."""
    t = max_tile
    while n_padded % t:
        t //= 2
    return t


def gcn_kernel(a_ref, h_ref, w_ref, bias_ref, o_ref, acc_ref):
    # grid = (row tiles [parallel], neighbor/reduction tiles [arbitrary])
    k = pl.program_id(1)

    @pl.when(k == 0)
    def _init():
        acc_ref[...] = jnp.zeros_like(acc_ref)

    # hw = H[k-block] @ W   (bf16 MXU, f32 accumulate)
    hw = jnp.dot(h_ref[...], w_ref[...], preferred_element_type=jnp.float32)
    # partial aggregation: A_hat[i-block, k-block] @ hw  (bf16 MXU, f32 acc)
    acc_ref[...] += jnp.dot(a_ref[...], hw.astype(a_ref.dtype),
                            preferred_element_type=jnp.float32)

    @pl.when(k == pl.num_programs(1) - 1)
    def _finalize():
        out = acc_ref[...] + bias_ref[...]          # [tm, Fp] + [1, Fp]
        o_ref[...] = jnp.maximum(out, 0.0).astype(o_ref.dtype)


def gcn_layer(adj, h, weight, norm, bias, *, max_tile=512):
    """adj: [N, N], h: [N, F_in], weight: [F_in, F_out], norm: [N, 1],
    bias: [F_out] -> [N, F_out] (f32)."""
    n, f_in = h.shape
    f_out = weight.shape[1]

    # Fold symmetric normalization into the adjacency once (reusable across
    # layers/steps):  A_hat = D^-1/2 A D^-1/2.
    a_hat = (norm * adj * norm.T).astype(jnp.bfloat16)

    # Lane-dense output: pad F_out to a multiple of 128.
    f_out_p = _round_up(f_out, 128)
    w_p = jnp.pad(weight.astype(jnp.bfloat16), ((0, 0), (0, f_out_p - f_out)))
    b_p = jnp.pad(bias.reshape(1, f_out).astype(jnp.float32),
                  ((0, 0), (0, f_out_p - f_out)))

    # Pad node dimension so it tiles cleanly.
    n_p = _round_up(n, 128)
    a_p = jnp.pad(a_hat, ((0, n_p - n), (0, n_p - n)))
    h_p = jnp.pad(h.astype(jnp.bfloat16), ((0, n_p - n), (0, 0)))

    tm = _pick_tile(n_p, max_tile)   # node-row tile     (parallel axis)
    tk = _pick_tile(n_p, max_tile)   # neighbor tile     (reduction axis)
    grid = (n_p // tm, n_p // tk)

    # Tile-derived VMEM budget: double-buffered inputs/outputs + accumulator,
    # 4x headroom, capped well under v7x's 64 MiB physical VMEM.
    tile_bytes = (2 * (tm * tk * 2            # A_hat tile (bf16)
                       + tk * f_in * 2        # H tile (bf16)
                       + f_in * f_out_p * 2   # W (bf16, resident)
                       + f_out_p * 4          # bias (f32)
                       + tm * f_out_p * 4)    # output tile (f32)
                  + tm * f_out_p * 4)         # accumulator
    vmem_limit = int(min(max(4 * tile_bytes, 8 << 20), 48 << 20))

    cost = pl.CostEstimate(
        flops=2 * grid[0] * n_p * f_in * f_out_p   # H@W (recomputed per row tile)
              + 2 * n_p * n_p * f_out_p,           # A_hat @ HW
        transcendentals=0,
        bytes_accessed=(a_p.size * 2 + grid[0] * h_p.size * 2 + w_p.size * 2
                        + b_p.size * 4 + n_p * f_out_p * 4),
    )

    out_p = pl.pallas_call(
        gcn_kernel,
        out_shape=jax.ShapeDtypeStruct((n_p, f_out_p), jnp.float32),
        grid_spec=pltpu.PrefetchScalarGridSpec(
            num_scalar_prefetch=0,
            grid=grid,
            in_specs=[
                pl.BlockSpec((tm, tk), lambda i, k: (i, k)),         # A_hat tile
                pl.BlockSpec((tk, f_in), lambda i, k: (k, 0)),       # H rows (k-block)
                pl.BlockSpec((f_in, f_out_p), lambda i, k: (0, 0)),  # W (resident)
                pl.BlockSpec((1, f_out_p), lambda i, k: (0, 0)),     # bias (resident)
            ],
            out_specs=pl.BlockSpec((tm, f_out_p), lambda i, k: (i, 0)),
            scratch_shapes=[pltpu.VMEM((tm, f_out_p), jnp.float32)],
        ),
        compiler_params=pltpu.CompilerParams(
            dimension_semantics=("parallel", "arbitrary"),
            vmem_limit_bytes=vmem_limit,
        ),
        cost_estimate=cost,
    )(a_p, h_p, w_p, b_p)

    # Slice off node / feature padding.
    return out_p[:n, :f_out]


def _reference(adj, h, weight, norm, bias):
    hw = (h @ weight) * norm
    agg = (adj @ hw) * norm
    return jnp.maximum(agg + bias.reshape(1, -1), 0.0)


def _make_inputs(key, n, in_feats, out_feats):
    k_h, k_adj, k_w, k_b = jax.random.split(key, 4)
    h = jax.random.normal(k_h, (n, in_feats), dtype=jnp.float32)
    adj = (jax.random.uniform(k_adj, (n, n)) < 0.1).astype(jnp.float32)
    adj = jnp.maximum(adj, jnp.eye(n, dtype=jnp.float32))   # self loops
    deg = jnp.maximum(jnp.sum(adj, axis=1, keepdims=True), 1.0)
    norm = jax.lax.rsqrt(deg)                                # DGL-style 1/sqrt(deg)
    stdv = 1.0 / math.sqrt(out_feats)
    weight = jax.random.uniform(k_w, (in_feats, out_feats),
                                minval=-stdv, maxval=stdv, dtype=jnp.float32)
    bias = jax.random.uniform(k_b, (out_feats,),
                              minval=-stdv, maxval=stdv, dtype=jnp.float32)
    return adj, h, weight, norm, bias


if __name__ == "__main__":
    key = jax.random.PRNGKey(0)
    IN_FEATS, OUT_FEATS = 32, 16

    # TODO(synk): dropout is treated as eval-mode identity (p has no effect at
    # inference); a training-mode variant would use pltpu.prng_* in-kernel.

    # Small demo (single-tile grid) + a multi-tile case that exercises the
    # reduction accumulator and parallel row-tile axis.
    for n in (64, 384):
        adj, h, weight, norm, bias = _make_inputs(key, n, IN_FEATS, OUT_FEATS)
        out = gcn_layer(adj, h, weight, norm, bias)
        out = jax.block_until_ready(out)
        ref = _reference(adj, h, weight, norm, bias)
        assert out.shape == ref.shape, "shape mismatch vs reference"
        # bf16 matmul inputs -> relaxed tolerance vs f32 reference.
        assert jnp.allclose(out, ref, atol=5e-2, rtol=5e-2), \
            f"mismatch vs reference at N={n}"

    print("KERNEL_OK")
</pallas_src>

<mosaic_0001>
module attributes {stable_mosaic.version = 11 : i64} {
  func.func @gcn_kernel(%arg0: i32, %arg1: i32, %arg2: memref<128x128xbf16, #tpu.memory_space<vmem>>, %arg3: memref<128x32xbf16, #tpu.memory_space<vmem>>, %arg4: memref<32x128xbf16, #tpu.memory_space<vmem>>, %arg5: memref<1x128xf32, #tpu.memory_space<vmem>>, %arg6: memref<128x128xf32, #tpu.memory_space<vmem>>, %arg7: memref<128x128xf32, #tpu.memory_space<vmem>>) attributes {dimension_semantics = [#tpu.dimension_semantics<parallel>, #tpu.dimension_semantics<arbitrary>], iteration_bounds = array<i64: 1, 1>, scalar_prefetch = 0 : i64, scratch_operands = 1 : i64, tpu.core_type = #tpu.core_type<tc>, window_params = [{transform_indices = @transform_0, window_bounds = array<i64: 128, 128>}, {transform_indices = @transform_1, window_bounds = array<i64: 128, 32>}, {pipeline_mode = #tpu.pipeline_mode<synchronous>, transform_indices = @transform_2, window_bounds = array<i64: 32, 128>}, {pipeline_mode = #tpu.pipeline_mode<synchronous>, transform_indices = @transform_3, window_bounds = array<i64: 1, 128>}, {transform_indices = @transform_4, window_bounds = array<i64: 128, 128>}]} {
    %c0_i32 = arith.constant 0 : i32
    %0 = arith.cmpi eq, %arg1, %c0_i32 : i32
    %1 = arith.extui %0 : i1 to i32
    %c0_i32_0 = arith.constant 0 : i32
    %2 = arith.cmpi ne, %1, %c0_i32_0 : i32
    scf.if %2 {
      %cst_13 = arith.constant 0.000000e+00 : f32
      %15 = vector.broadcast %cst_13 : f32 to vector<128x128xf32>
      %c0_14 = arith.constant 0 : index
      %c0_15 = arith.constant 0 : index
      %16 = vector.load %arg7[%c0_14, %c0_15] : memref<128x128xf32, #tpu.memory_space<vmem>>, vector<128x128xf32>
      tpu.vector_store %arg7[%c0_14, %c0_15], %15 {strides = array<i32>} : memref<128x128xf32, #tpu.memory_space<vmem>>, vector<128x128xf32>,
    } else {
    }
    %c0 = arith.constant 0 : index
    %c0_1 = arith.constant 0 : index
    %3 = vector.load %arg3[%c0, %c0_1] : memref<128x32xbf16, #tpu.memory_space<vmem>>, vector<128x32xbf16>
    %c0_2 = arith.constant 0 : index
    %c0_3 = arith.constant 0 : index
    %4 = vector.load %arg4[%c0_2, %c0_3] : memref<32x128xbf16, #tpu.memory_space<vmem>>, vector<32x128xbf16>
    %cst = arith.constant dense<0.000000e+00> : vector<128x128xf32>
    %5 = tpu.matmul %3, %4, %cst {dimension_numbers = #tpu.dot_dimension_numbers<[1], [0], [0], [1], [0, 0, 1, 1], [], []>} : vector<128x32xbf16>, vector<32x128xbf16>, vector<128x128xf32> -> vector<128x128xf32>
    %c0_4 = arith.constant 0 : index
    %c0_5 = arith.constant 0 : index
    %6 = vector.load %arg7[%c0_4, %c0_5] : memref<128x128xf32, #tpu.memory_space<vmem>>, vector<128x128xf32>
    %c0_6 = arith.constant 0 : index
    %c0_7 = arith.constant 0 : index
    %7 = vector.load %arg2[%c0_6, %c0_7] : memref<128x128xbf16, #tpu.memory_space<vmem>>, vector<128x128xbf16>
    %8 = arith.truncf %5 : vector<128x128xf32> to vector<128x128xbf16>
    %cst_8 = arith.constant dense<0.000000e+00> : vector<128x128xf32>
    %9 = tpu.matmul %7, %8, %cst_8 {dimension_numbers = #tpu.dot_dimension_numbers<[1], [0], [0], [1], [0, 0, 1, 1], [], []>} : vector<128x128xbf16>, vector<128x128xbf16>, vector<128x128xf32> -> vector<128x128xf32>
    %10 = arith.addf %6, %9 : vector<128x128xf32>
    %c0_9 = arith.constant 0 : index
    %c0_10 = arith.constant 0 : index
    %11 = vector.load %arg7[%c0_9, %c0_10] : memref<128x128xf32, #tpu.memory_space<vmem>>, vector<128x128xf32>
    tpu.vector_store %arg7[%c0_9, %c0_10], %10 {strides = array<i32>} : memref<128x128xf32, #tpu.memory_space<vmem>>, vector<128x128xf32>,
    %c0_i32_11 = arith.constant 0 : i32
    %12 = arith.cmpi eq, %arg1, %c0_i32_11 : i32
    %13 = arith.extui %12 : i1 to i32
    %c0_i32_12 = arith.constant 0 : i32
    %14 = arith.cmpi ne, %13, %c0_i32_12 : i32
    scf.if %14 {
      %c0_13 = arith.constant 0 : index
      %c0_14 = arith.constant 0 : index
      %15 = vector.load %arg7[%c0_13, %c0_14] : memref<128x128xf32, #tpu.memory_space<vmem>>, vector<128x128xf32>
      %c0_15 = arith.constant 0 : index
      %c0_16 = arith.constant 0 : index
      %16 = vector.load %arg5[%c0_15, %c0_16] : memref<1x128xf32, #tpu.memory_space<vmem>>, vector<1x128xf32>
      %17 = vector.broadcast %16 : vector<1x128xf32> to vector<128x128xf32>
      %18 = arith.addf %15, %17 : vector<128x128xf32>
      %cst_17 = arith.constant 0.000000e+00 : f32
      %19 = vector.broadcast %cst_17 : f32 to vector<128x128xf32>
      %20 = arith.maximumf %18, %19 : vector<128x128xf32>
      %c0_18 = arith.constant 0 : index
      %c0_19 = arith.constant 0 : index
      %21 = vector.load %arg6[%c0_18, %c0_19] : memref<128x128xf32, #tpu.memory_space<vmem>>, vector<128x128xf32>
      tpu.vector_store %arg6[%c0_18, %c0_19], %20 {strides = array<i32>} : memref<128x128xf32, #tpu.memory_space<vmem>>, vector<128x128xf32>,
    } else {
    }
    return
  }
  func.func @transform_0(%arg0: i32, %arg1: i32) -> (i32, i32) {
    %c0_i32 = arith.constant 0 : i32
    return %arg0, %arg1 : i32, i32
  }
  func.func @transform_1(%arg0: i32, %arg1: i32) -> (i32, i32) {
    %c0_i32 = arith.constant 0 : i32
    %c0_i32_0 = arith.constant 0 : i32
    return %arg1, %c0_i32 : i32, i32
  }
  func.func @transform_2(%arg0: i32, %arg1: i32) -> (i32, i32) {
    %c0_i32 = arith.constant 0 : i32
    %c0_i32_0 = arith.constant 0 : i32
    %c0_i32_1 = arith.constant 0 : i32
    return %c0_i32, %c0_i32_0 : i32, i32
  }
  func.func @transform_3(%arg0: i32, %arg1: i32) -> (i32, i32) {
    %c0_i32 = arith.constant 0 : i32
    %c0_i32_0 = arith.constant 0 : i32
    %c0_i32_1 = arith.constant 0 : i32
    return %c0_i32, %c0_i32_0 : i32, i32
  }
  func.func @transform_4(%arg0: i32, %arg1: i32) -> (i32, i32) {
    %c0_i32 = arith.constant 0 : i32
    %c0_i32_0 = arith.constant 0 : i32
    return %arg0, %c0_i32 : i32, i32
  }
}

</mosaic_0001>

<llo_original>
// kernel: tpu_custom_call.1
$region0: #{tpu_custom_call.1}
  #allocation0 [shape = 'u32[]', space=smem, size = 0x4, offset = 0x4, fixed_abs, tag = 'smem constant byte address 0x4 - core index']
  #allocation1 [shape = 'u32[144,128]{1,0:T(1,128)}', space=vmem, size = 0x12000, scoped, tag = 'internal scratch']
  #allocation2 [shape = 'f32[128,128]{1,0:T(8,128)}', space=vmem, size = 0x10000, scoped, tag = 'scratch operand']
  %s0 = inlined_call_operand.vmem [shape: bf16[128,128], index: 0, kind: input, shape index: {}]
  %s1 = inlined_call_operand.vmem [shape: bf16[128,32], index: 1, kind: input, shape index: {}]
  %s2 = inlined_call_operand.vmem [shape: bf16[32,128], index: 2, kind: input, shape index: {}]
  %s3 = inlined_call_operand.vmem [shape: f32[1,128], index: 3, kind: input, shape index: {}]
  %s4 = inlined_call_operand.hbm [shape: f32[128,128], index: 4, kind: output, shape index: {}]
  %s5 = sld [smem:[#allocation0]]
  $region34: #{tpu_custom_call.1} parent=0
    _
  %s7 = ssub.s32 1, %s5
  %s8 = scalar_select 0, %s7, %s5
  $region1: #{tpu_custom_call.1} parent=0
    #allocation3 [shape = 'u8[65536]{0}', space=vmem, size = 0x10000, scoped, tag = 'output window, operand 0, single buffered']
    #allocation4 [shape = 's32[1]{0}', space=sflag, size = 0x4, scoped, tag = 'scoped memory for tpu_custom_call.1']
    %9 = vsyncpa [#allocation4], 0
    // Predicated region
    $region2: #{tpu_custom_call.1} parent=1 // pred_check
      _
    $region3: #{tpu_custom_call.1} parent=1 // pred_check_branch
      %11 = sbr.rel (0) target = $region5
    $region4: #{tpu_custom_call.1} parent=1 // pred_region
      _
    $region5: #{tpu_custom_call.1} parent=1 // pred_fallthru
      _
    // Predicated region
    $region6: #{tpu_custom_call.1} parent=1 // pred_check
      _
    $region7: #{tpu_custom_call.1} parent=1 // pred_check_branch
      %13 = sbr.rel (0) target = $region9
    $region8: #{tpu_custom_call.1} parent=1 // pred_region
      _
    $region9: #{tpu_custom_call.1} parent=1 // pred_fallthru
      _
    // Predicated region
    $region10: #{tpu_custom_call.1} parent=1 // pred_check
      _
    $region11: #{tpu_custom_call.1} parent=1 // pred_check_branch
      %15 = sbr.rel (0) target = $region13
    $region12: #{tpu_custom_call.1} parent=1 // pred_region
      _
    $region13: #{tpu_custom_call.1} parent=1 // pred_fallthru
      _
    // Predicated region
    $region14: #{tpu_custom_call.1} parent=1 // pred_check
      _
    $region15: #{tpu_custom_call.1} parent=1 // pred_check_branch
      %17 = sbr.rel (0) target = $region17
    $region16: #{tpu_custom_call.1} parent=1 // pred_region
      _
    $region17: #{tpu_custom_call.1} parent=1 // pred_fallthru
      _
    %p19 = scmp.eq.s32.totalorder 0, 0
    // Predicated region
    $region18: #{tpu_custom_call.1} parent=1 // pred_check
      %p20 = pneg %p19
    $region19: #{tpu_custom_call.1} parent=1 // pred_check_branch
      %22 = sbr.rel (%p20) target = $region21
    $region20: #{tpu_custom_call.1} parent=1 // pred_region
      %23 = vst [vmem:[#allocation2] sm:$0xff] 0.0
      %24 = vst [vmem:[#allocation2 + $0x8] sm:$0xff] 0.0
      %25 = vst [vmem:[#allocation2 + $0x10] sm:$0xff] 0.0
      %26 = vst [vmem:[#allocation2 + $0x18] sm:$0xff] 0.0
      %27 = vst [vmem:[#allocation2 + $0x20] sm:$0xff] 0.0
      %28 = vst [vmem:[#allocation2 + $0x28] sm:$0xff] 0.0
      %29 = vst [vmem:[#allocation2 + $0x30] sm:$0xff] 0.0
      %30 = vst [vmem:[#allocation2 + $0x38] sm:$0xff] 0.0
      %31 = vst [vmem:[#allocation2 + $0x40] sm:$0xff] 0.0
      %32 = vst [vmem:[#allocation2 + $0x48] sm:$0xff] 0.0
      %33 = vst [vmem:[#allocation2 + $0x50] sm:$0xff] 0.0
      %34 = vst [vmem:[#allocation2 + $0x58] sm:$0xff] 0.0
      %35 = vst [vmem:[#allocation2 + $0x60] sm:$0xff] 0.0
      %36 = vst [vmem:[#allocation2 + $0x68] sm:$0xff] 0.0
      %37 = vst [vmem:[#allocation2 + $0x70] sm:$0xff] 0.0
      %38 = vst [vmem:[#allocation2 + $0x78] sm:$0xff] 0.0
    $region21: #{tpu_custom_call.1} parent=1 // pred_fallthru
      _
    %v39 = vld [vmem:[%s1] sm:$0xf]
    %v40 = vld [vmem:[%s1 + $0x4] sm:$0xf]
    %v41 = vld [vmem:[%s1 + $0x8] sm:$0xf]
    %v42 = vld [vmem:[%s1 + $0xc] sm:$0xf]
    %v43 = vld [vmem:[%s1 + $0x10] sm:$0xf]
    %v44 = vld [vmem:[%s1 + $0x14] sm:$0xf]
    %v45 = vld [vmem:[%s1 + $0x18] sm:$0xf]
    %v46 = vld [vmem:[%s1 + $0x1c] sm:$0xf]
    %v47 = vld [vmem:[%s1 + $0x20] sm:$0xf]
    %v48 = vld [vmem:[%s1 + $0x24] sm:$0xf]
    %v49 = vld [vmem:[%s1 + $0x28] sm:$0xf]
    %v50 = vld [vmem:[%s1 + $0x2c] sm:$0xf]
    %v51 = vld [vmem:[%s1 + $0x30] sm:$0xf]
    %v52 = vld [vmem:[%s1 + $0x34] sm:$0xf]
    %v53 = vld [vmem:[%s1 + $0x38] sm:$0xf]
    %v54 = vld [vmem:[%s1 + $0x3c] sm:$0xf]
    %v55 = vld [vmem:[%s2] sm:$0xf]
    %v56 = vld [vmem:[%s2 + $0x4] sm:$0xf]
    %v57 = vld [vmem:[%s2 + $0x8] sm:$0xf]
    %v58 = vld [vmem:[%s2 + $0xc] sm:$0xf]
    %v75 = vunpack.c.l.b16 %v39
    %v76 = vunpack.c.l.b16 %v40
    %v77 = vunpack.c.l.b16 %v41
    %v78 = vunpack.c.l.b16 %v42
    %v79 = vunpack.c.l.b16 %v43
    %v80 = vunpack.c.l.b16 %v44
    %v81 = vunpack.c.l.b16 %v45
    %v82 = vunpack.c.l.b16 %v46
    %v83 = vunpack.c.l.b16 %v47
    %v84 = vunpack.c.l.b16 %v48
    %v85 = vunpack.c.l.b16 %v49
    %v86 = vunpack.c.l.b16 %v50
    %v87 = vunpack.c.l.b16 %v51
    %v88 = vunpack.c.l.b16 %v52
    %v89 = vunpack.c.l.b16 %v53
    %v90 = vunpack.c.l.b16 %v54
    %v91 = vpack.c.b16 %v76, %v75
    %v92 = vpack.c.b16 %v78, %v77
    %v93 = vpack.c.b16 %v80, %v79
    %v94 = vpack.c.b16 %v82, %v81
    %v95 = vpack.c.b16 %v84, %v83
    %v96 = vpack.c.b16 %v86, %v85
    %v97 = vpack.c.b16 %v88, %v87
    %v98 = vpack.c.b16 %v90, %v89
    %v103 = vunpack.c.l.b16 %v55
    %v104 = vunpack.c.l.b16 %v56
    %v105 = vunpack.c.l.b16 %v57
    %v106 = vunpack.c.l.b16 %v58
    %v107 = vpack.c.b16 %v104, %v103
    %v108 = vpack.c.b16 %v106, %v105
    %vm111 = vcmask 261120
    %v113 = vsel %vm111, %v91, 0
    %v116 = vsel %vm111, %v92, 0
    %v119 = vsel %vm111, %v93, 0
    %v122 = vsel %vm111, %v94, 0
    %v125 = vsel %vm111, %v95, 0
    %v128 = vsel %vm111, %v96, 0
    %v131 = vsel %vm111, %v97, 0
    %v134 = vsel %vm111, %v98, 0
    %136 = vmatprep.subr.bf16.mxu0 0
    %137 = vmatpush1.bf16.msra.mxu0 %v107
    %138 = vmatprep.subr.bf16.mxu0 0
    %139 = vmatpush1.bf16.msra.mxu0 %v108
    %140 = vmatprep.subr.bf16.mxu0 0
    %141 = vmatpush1.bf16.msra.mxu0 0
    %142 = vmatprep.subr.bf16.mxu0 0
    %143 = vmatpush1.bf16.msra.mxu0 0
    %144 = vmatprep.subr.bf16.mxu0 0
    %145 = vmatpush1.bf16.msra.mxu0 0
    %146 = vmatprep.subr.bf16.mxu0 0
    %147 = vmatpush1.bf16.msra.mxu0 0
    %148 = vmatprep.subr.bf16.mxu0 0
    %149 = vmatpush1.bf16.msra.mxu0 0
    %150 = vmatprep.subr.bf16.mxu0 0
    %151 = vmatpush1.bf16.msra.mxu0 0
    %152 = vmatprep.subr.bf16.mxu0 0
    %153 = vmatpush1.bf16.msra.mxu0 0
    %154 = vmatprep.subr.bf16.mxu0 0
    %155 = vmatpush1.bf16.msra.mxu0 0
    %156 = vmatprep.subr.bf16.mxu0 0
    %157 = vmatpush1.bf16.msra.mxu0 0
    %158 = vmatprep.subr.bf16.mxu0 0
    %159 = vmatpush1.bf16.msra.mxu0 0
    %160 = vmatprep.subr.bf16.mxu0 0
    %161 = vmatpush1.bf16.msra.mxu0 0
    %162 = vmatprep.subr.bf16.mxu0 0
    %163 = vmatpush1.bf16.msra.mxu0 0
    %164 = vmatprep.subr.bf16.mxu0 0
    %165 = vmatpush1.bf16.msra.mxu0 0
    %166 = vmatprep.subr.bf16.mxu0 0
    %167 = vmatpush1.bf16.msra.mxu0 0
    %168 = vmatprep.mubr.bf16.mxu0 0
    %169 = vmatmul.mubr.bf16.gmra.mrb[0].mxu0 %v113
    %v170 = vpop.f32.mrb[0].mxu0
    %v171 = vadd.f32 0.0, %v170
    %v172 = vpop.f32.mrb[0].mxu0
    %v173 = vpop.f32.mrb[0].mxu0
    %v174 = vadd.f32 0.0, %v173
    %v175 = vpop.f32.mrb[0].mxu0
    %176 = vmatprep.mubr.bf16.mxu0 0
    %177 = vmatmul.mubr.bf16.gmra.mrb[0].mxu0 %v116
    %v178 = vpop.f32.mrb[0].mxu0
    %v179 = vadd.f32 0.0, %v178
    %v180 = vpop.f32.mrb[0].mxu0
    %v181 = vpop.f32.mrb[0].mxu0
    %v182 = vadd.f32 0.0, %v181
    %v183 = vpop.f32.mrb[0].mxu0
    %184 = vmatprep.mubr.bf16.mxu0 0
    %185 = vmatmul.mubr.bf16.gmra.mrb[0].mxu0 %v119
    %v186 = vpop.f32.mrb[0].mxu0
    %v187 = vadd.f32 0.0, %v186
    %v188 = vpop.f32.mrb[0].mxu0
    %v189 = vpop.f32.mrb[0].mxu0
    %v190 = vadd.f32 0.0, %v189
    %v191 = vpop.f32.mrb[0].mxu0
    %192 = vmatprep.mubr.bf16.mxu0 0
    %193 = vmatmul.mubr.bf16.gmra.mrb[0].mxu0 %v122
    %v194 = vpop.f32.mrb[0].mxu0
    %v195 = vadd.f32 0.0, %v194
    %v196 = vpop.f32.mrb[0].mxu0
    %v197 = vpop.f32.mrb[0].mxu0
    %v198 = vadd.f32 0.0, %v197
    %v199 = vpop.f32.mrb[0].mxu0
    %200 = vmatprep.mubr.bf16.mxu0 0
    %201 = vmatmul.mubr.bf16.gmra.mrb[0].mxu0 %v125
    %v202 = vpop.f32.mrb[0].mxu0
    %v203 = vadd.f32 0.0, %v202
    %v204 = vpop.f32.mrb[0].mxu0
    %v205 = vpop.f32.mrb[0].mxu0
    %v206 = vadd.f32 0.0, %v205
    %v207 = vpop.f32.mrb[0].mxu0
    %208 = vmatprep.mubr.bf16.mxu0 0
    %209 = vmatmul.mubr.bf16.gmra.mrb[0].mxu0 %v128
    %v210 = vpop.f32.mrb[0].mxu0
    %v211 = vadd.f32 0.0, %v210
    %v212 = vpop.f32.mrb[0].mxu0
    %v213 = vpop.f32.mrb[0].mxu0
    %v214 = vadd.f32 0.0, %v213
    %v215 = vpop.f32.mrb[0].mxu0
    %216 = vmatprep.mubr.bf16.mxu0 0
    %217 = vmatmul.mubr.bf16.gmra.mrb[0].mxu0 %v131
    %v218 = vpop.f32.mrb[0].mxu0
    %v219 = vadd.f32 0.0, %v218
    %v220 = vpop.f32.mrb[0].mxu0
    %v221 = vpop.f32.mrb[0].mxu0
    %v222 = vadd.f32 0.0, %v221
    %v223 = vpop.f32.mrb[0].mxu0
    %224 = vmatprep.mubr.bf16.mxu0 0
    %225 = vmatmul.mubr.bf16.gmra.mrb[0].mxu0 %v134
    %v226 = vpop.f32.mrb[0].mxu0
    %v227 = vadd.f32 0.0, %v226
    %v228 = vpop.f32.mrb[0].mxu0
    %v229 = vpop.f32.mrb[0].mxu0
    %v230 = vadd.f32 0.0, %v229
    %v231 = vpop.f32.mrb[0].mxu0
    %232 = vdwg.mxu0
    %v233 = vld [vmem:[#allocation2] sm:$0xff]
    %v234 = vld [vmem:[#allocation2 + $0x8] sm:$0xff]
    %v235 = vld [vmem:[#allocation2 + $0x10] sm:$0xff]
    %v236 = vld [vmem:[#allocation2 + $0x18] sm:$0xff]
    %v237 = vld [vmem:[#allocation2 + $0x20] sm:$0xff]
    %v238 = vld [vmem:[#allocation2 + $0x28] sm:$0xff]
    %v239 = vld [vmem:[#allocation2 + $0x30] sm:$0xff]
    %v240 = vld [vmem:[#allocation2 + $0x38] sm:$0xff]
    %v241 = vld [vmem:[#allocation2 + $0x40] sm:$0xff]
    %v242 = vld [vmem:[#allocation2 + $0x48] sm:$0xff]
    %v243 = vld [vmem:[#allocation2 + $0x50] sm:$0xff]
    %v244 = vld [vmem:[#allocation2 + $0x58] sm:$0xff]
    %v245 = vld [vmem:[#allocation2 + $0x60] sm:$0xff]
    %v246 = vld [vmem:[#allocation2 + $0x68] sm:$0xff]
    %v247 = vld [vmem:[#allocation2 + $0x70] sm:$0xff]
    %v248 = vld [vmem:[#allocation2 + $0x78] sm:$0xff]
    %v249 = vld [vmem:[%s0] sm:$0xf]
    %v250 = vld [vmem:[%s0 + $0x4] sm:$0xf]
    %v251 = vld [vmem:[%s0 + $0x8] sm:$0xf]
    %v252 = vld [vmem:[%s0 + $0xc] sm:$0xf]
    %v253 = vld [vmem:[%s0 + $0x10] sm:$0xf]
    %v254 = vld [vmem:[%s0 + $0x14] sm:$0xf]
    %v255 = vld [vmem:[%s0 + $0x18] sm:$0xf]
    %v256 = vld [vmem:[%s0 + $0x1c] sm:$0xf]
    %v257 = vld [vmem:[%s0 + $0x20] sm:$0xf]
    %v258 = vld [vmem:[%s0 + $0x24] sm:$0xf]
    %v259 = vld [vmem:[%s0 + $0x28] sm:$0xf]
    %v260 = vld [vmem:[%s0 + $0x2c] sm:$0xf]
    %v261 = vld [vmem:[%s0 + $0x30] sm:$0xf]
    %v262 = vld [vmem:[%s0 + $0x34] sm:$0xf]
    %v263 = vld [vmem:[%s0 + $0x38] sm:$0xf]
    %v264 = vld [vmem:[%s0 + $0x3c] sm:$0xf]
    %v265 = vpack.c.bf16 %v174, %v171
    %v266 = vpack.c.bf16 %v182, %v179
    %v267 = vpack.c.bf16 %v190, %v187
    %v268 = vpack.c.bf16 %v198, %v195
    %v269 = vpack.c.bf16 %v206, %v203
    %v270 = vpack.c.bf16 %v214, %v211
    %v271 = vpack.c.bf16 %v222, %v219
    %v272 = vpack.c.bf16 %v230, %v227
    %v289 = vunpack.c.l.b16 %v249
    %v290 = vunpack.c.l.b16 %v250
    %v291 = vunpack.c.l.b16 %v251
    %v292 = vunpack.c.l.b16 %v252
    %v293 = vunpack.c.l.b16 %v253
    %v294 = vunpack.c.l.b16 %v254
    %v295 = vunpack.c.l.b16 %v255
    %v296 = vunpack.c.l.b16 %v256
    %v297 = vunpack.c.l.b16 %v257
    %v298 = vunpack.c.l.b16 %v258
    %v299 = vunpack.c.l.b16 %v259
    %v300 = vunpack.c.l.b16 %v260
    %v301 = vunpack.c.l.b16 %v261
    %v302 = vunpack.c.l.b16 %v262
    %v303 = vunpack.c.l.b16 %v263
    %v304 = vunpack.c.l.b16 %v264
    %v305 = vpack.c.b16 %v290, %v289
    %v306 = vpack.c.b16 %v292, %v291
    %v307 = vpack.c.b16 %v294, %v293
    %v308 = vpack.c.b16 %v296, %v295
    %v309 = vpack.c.b16 %v298, %v297
    %v310 = vpack.c.b16 %v300, %v299
    %v311 = vpack.c.b16 %v302, %v301
    %v312 = vpack.c.b16 %v304, %v303
    %321 = vmatprep.subr.bf16.mxu0 0
    %322 = vmatpush1.bf16.msra.mxu0 %v265
    %323 = vmatprep.subr.bf16.mxu0 0
    %324 = vmatpush1.bf16.msra.mxu0 %v266
    %325 = vmatprep.subr.bf16.mxu0 0
    %326 = vmatpush1.bf16.msra.mxu0 %v267
    %327 = vmatprep.subr.bf16.mxu0 0
    %328 = vmatpush1.bf16.msra.mxu0 %v268
    %329 = vmatprep.subr.bf16.mxu0 0
    %330 = vmatpush1.bf16.msra.mxu0 %v269
    %331 = vmatprep.subr.bf16.mxu0 0
    %332 = vmatpush1.bf16.msra.mxu0 %v270
    %333 = vmatprep.subr.bf16.mxu0 0
    %334 = vmatpush1.bf16.msra.mxu0 %v271
    %335 = vmatprep.subr.bf16.mxu0 0
    %336 = vmatpush1.bf16.msra.mxu0 %v272
    %337 = vmatprep.subr.bf16.mxu0 0
    %338 = vmatpush1.bf16.msra.mxu0 0
    %339 = vmatprep.subr.bf16.mxu0 0
    %340 = vmatpush1.bf16.msra.mxu0 0
    %341 = vmatprep.subr.bf16.mxu0 0
    %342 = vmatpush1.bf16.msra.mxu0 0
    %343 = vmatprep.subr.bf16.mxu0 0
    %344 = vmatpush1.bf16.msra.mxu0 0
    %345 = vmatprep.subr.bf16.mxu0 0
    %346 = vmatpush1.bf16.msra.mxu0 0
    %347 = vmatprep.subr.bf16.mxu0 0
    %348 = vmatpush1.bf16.msra.mxu0 0
    %349 = vmatprep.subr.bf16.mxu0 0
    %350 = vmatpush1.bf16.msra.mxu0 0
    %351 = vmatprep.subr.bf16.mxu0 0
    %352 = vmatpush1.bf16.msra.mxu0 0
    %353 = vmatprep.mubr.bf16.mxu0 0
    %354 = vmatmul.mubr.bf16.gmra.mrb[0].mxu0 %v305
    %v355 = vpop.f32.mrb[0].mxu0
    %v356 = vadd.f32 0.0, %v355
    %v357 = vpop.f32.mrb[0].mxu0
    %v358 = vpop.f32.mrb[0].mxu0
    %v359 = vadd.f32 0.0, %v358
    %v360 = vpop.f32.mrb[0].mxu0
    %361 = vmatprep.mubr.bf16.mxu0 0
    %362 = vmatmul.mubr.bf16.gmra.mrb[0].mxu0 %v306
    %v363 = vpop.f32.mrb[0].mxu0
    %v364 = vadd.f32 0.0, %v363
    %v365 = vpop.f32.mrb[0].mxu0
    %v366 = vpop.f32.mrb[0].mxu0
    %v367 = vadd.f32 0.0, %v366
    %v368 = vpop.f32.mrb[0].mxu0
    %369 = vmatprep.mubr.bf16.mxu0 0
    %370 = vmatmul.mubr.bf16.gmra.mrb[0].mxu0 %v307
    %v371 = vpop.f32.mrb[0].mxu0
    %v372 = vadd.f32 0.0, %v371
    %v373 = vpop.f32.mrb[0].mxu0
    %v374 = vpop.f32.mrb[0].mxu0
    %v375 = vadd.f32 0.0, %v374
    %v376 = vpop.f32.mrb[0].mxu0
    %377 = vmatprep.mubr.bf16.mxu0 0
    %378 = vmatmul.mubr.bf16.gmra.mrb[0].mxu0 %v308
    %v379 = vpop.f32.mrb[0].mxu0
    %v380 = vadd.f32 0.0, %v379
    %v381 = vpop.f32.mrb[0].mxu0
    %v382 = vpop.f32.mrb[0].mxu0
    %v383 = vadd.f32 0.0, %v382
    %v384 = vpop.f32.mrb[0].mxu0
    %385 = vmatprep.mubr.bf16.mxu0 0
    %386 = vmatmul.mubr.bf16.gmra.mrb[0].mxu0 %v309
    %v387 = vpop.f32.mrb[0].mxu0
    %v388 = vadd.f32 0.0, %v387
    %v389 = vpop.f32.mrb[0].mxu0
    %v390 = vpop.f32.mrb[0].mxu0
    %v391 = vadd.f32 0.0, %v390
    %v392 = vpop.f32.mrb[0].mxu0
    %393 = vmatprep.mubr.bf16.mxu0 0
    %394 = vmatmul.mubr.bf16.gmra.mrb[0].mxu0 %v310
    %v395 = vpop.f32.mrb[0].mxu0
    %v396 = vadd.f32 0.0, %v395
    %v397 = vpop.f32.mrb[0].mxu0
    %v398 = vpop.f32.mrb[0].mxu0
    %v399 = vadd.f32 0.0, %v398
    %v400 = vpop.f32.mrb[0].mxu0
    %401 = vmatprep.mubr.bf16.mxu0 0
    %402 = vmatmul.mubr.bf16.gmra.mrb[0].mxu0 %v311
    %v403 = vpop.f32.mrb[0].mxu0
    %v404 = vadd.f32 0.0, %v403
    %v405 = vpop.f32.mrb[0].mxu0
    %v406 = vpop.f32.mrb[0].mxu0
    %v407 = vadd.f32 0.0, %v406
    %v408 = vpop.f32.mrb[0].mxu0
    %409 = vmatprep.mubr.bf16.mxu0 0
    %410 = vmatmul.mubr.bf16.gmra.mrb[0].mxu0 %v312
    %v411 = vpop.f32.mrb[0].mxu0
    %v412 = vadd.f32 0.0, %v411
    %v413 = vpop.f32.mrb[0].mxu0
    %v414 = vpop.f32.mrb[0].mxu0
    %v415 = vadd.f32 0.0, %v414
    %v416 = vpop.f32.mrb[0].mxu0
    %417 = vdwg.mxu0
    %v418 = vadd.f32 %v233, %v356
    %v419 = vadd.f32 %v234, %v359
    %v420 = vadd.f32 %v235, %v364
    %v421 = vadd.f32 %v236, %v367
    %v422 = vadd.f32 %v237, %v372
    %v423 = vadd.f32 %v238, %v375
    %v424 = vadd.f32 %v239, %v380
    %v425 = vadd.f32 %v240, %v383
    %v426 = vadd.f32 %v241, %v388
    %v427 = vadd.f32 %v242, %v391
    %v428 = vadd.f32 %v243, %v396
    %v429 = vadd.f32 %v244, %v399
    %v430 = vadd.f32 %v245, %v404
    %v431 = vadd.f32 %v246, %v407
    %v432 = vadd.f32 %v247, %v412
    %v433 = vadd.f32 %v248, %v415
    %434 = vst [vmem:[#allocation2] sm:$0xff] %v418
    %435 = vst [vmem:[#allocation2 + $0x8] sm:$0xff] %v419
    %436 = vst [vmem:[#allocation2 + $0x10] sm:$0xff] %v420
    %437 = vst [vmem:[#allocation2 + $0x18] sm:$0xff] %v421
    %438 = vst [vmem:[#allocation2 + $0x20] sm:$0xff] %v422
    %439 = vst [vmem:[#allocation2 + $0x28] sm:$0xff] %v423
    %440 = vst [vmem:[#allocation2 + $0x30] sm:$0xff] %v424
    %441 = vst [vmem:[#allocation2 + $0x38] sm:$0xff] %v425
    %442 = vst [vmem:[#allocation2 + $0x40] sm:$0xff] %v426
    %443 = vst [vmem:[#allocation2 + $0x48] sm:$0xff] %v427
    %444 = vst [vmem:[#allocation2 + $0x50] sm:$0xff] %v428
    %445 = vst [vmem:[#allocation2 + $0x58] sm:$0xff] %v429
    %446 = vst [vmem:[#allocation2 + $0x60] sm:$0xff] %v430
    %447 = vst [vmem:[#allocation2 + $0x68] sm:$0xff] %v431
    %448 = vst [vmem:[#allocation2 + $0x70] sm:$0xff] %v432
    %449 = vst [vmem:[#allocation2 + $0x78] sm:$0xff] %v433
    // Predicated region
    $region22: #{tpu_custom_call.1} parent=1 // pred_check
      %p450 = pneg %p19
    $region23: #{tpu_custom_call.1} parent=1 // pred_check_branch
      %452 = sbr.rel (%p450) target = $region25
    $region24: #{tpu_custom_call.1} parent=1 // pred_region
      %v453 = vld [vmem:[#allocation2] sm:$0xff]
      %v454 = vld [vmem:[#allocation2 + $0x8] sm:$0xff]
      %v455 = vld [vmem:[#allocation2 + $0x10] sm:$0xff]
      %v456 = vld [vmem:[#allocation2 + $0x18] sm:$0xff]
      %v457 = vld [vmem:[#allocation2 + $0x20] sm:$0xff]
      %v458 = vld [vmem:[#allocation2 + $0x28] sm:$0xff]
      %v459 = vld [vmem:[#allocation2 + $0x30] sm:$0xff]
      %v460 = vld [vmem:[#allocation2 + $0x38] sm:$0xff]
      %v461 = vld [vmem:[#allocation2 + $0x40] sm:$0xff]
      %v462 = vld [vmem:[#allocation2 + $0x48] sm:$0xff]
      %v463 = vld [vmem:[#allocation2 + $0x50] sm:$0xff]
      %v464 = vld [vmem:[#allocation2 + $0x58] sm:$0xff]
      %v465 = vld [vmem:[#allocation2 + $0x60] sm:$0xff]
      %v466 = vld [vmem:[#allocation2 + $0x68] sm:$0xff]
      %v467 = vld [vmem:[#allocation2 + $0x70] sm:$0xff]
      %v468 = vld [vmem:[#allocation2 + $0x78] sm:$0xff]
      %v469 = vld [vmem:[%s3] sm:$0x1]
      %v471 = vlaneseq
      %v472 = vshrl.u32 %v471, 7
      %v473 = vsub.s32 0, %v472
      %v474 = vrot.slane %v469, %v473
      %v476 = vadd.f32 %v453, %v474
      %v477 = vadd.f32 %v454, %v474
      %v478 = vadd.f32 %v455, %v474
      %v479 = vadd.f32 %v456, %v474
      %v480 = vadd.f32 %v457, %v474
      %v481 = vadd.f32 %v458, %v474
      %v482 = vadd.f32 %v459, %v474
      %v483 = vadd.f32 %v460, %v474
      %v484 = vadd.f32 %v461, %v474
      %v485 = vadd.f32 %v462, %v474
      %v486 = vadd.f32 %v463, %v474
      %v487 = vadd.f32 %v464, %v474
      %v488 = vadd.f32 %v465, %v474
      %v489 = vadd.f32 %v466, %v474
      %v490 = vadd.f32 %v467, %v474
      %v491 = vadd.f32 %v468, %v474
      %v492 = vmax.f32 %v476, 0.0
      %v493 = vmax.f32 %v477, 0.0
      %v494 = vmax.f32 %v478, 0.0
      %v495 = vmax.f32 %v479, 0.0
      %v496 = vmax.f32 %v480, 0.0
      %v497 = vmax.f32 %v481, 0.0
      %v498 = vmax.f32 %v482, 0.0
      %v499 = vmax.f32 %v483, 0.0
      %v500 = vmax.f32 %v484, 0.0
      %v501 = vmax.f32 %v485, 0.0
      %v502 = vmax.f32 %v486, 0.0
      %v503 = vmax.f32 %v487, 0.0
      %v504 = vmax.f32 %v488, 0.0
      %v505 = vmax.f32 %v489, 0.0
      %v506 = vmax.f32 %v490, 0.0
      %v507 = vmax.f32 %v491, 0.0
      %508 = vst [vmem:[#allocation3] sm:$0xff] %v492
      %509 = vst [vmem:[#allocation3 + $0x8] sm:$0xff] %v493
      %510 = vst [vmem:[#allocation3 + $0x10] sm:$0xff] %v494
      %511 = vst [vmem:[#allocation3 + $0x18] sm:$0xff] %v495
      %512 = vst [vmem:[#allocation3 + $0x20] sm:$0xff] %v496
      %513 = vst [vmem:[#allocation3 + $0x28] sm:$0xff] %v497
      %514 = vst [vmem:[#allocation3 + $0x30] sm:$0xff] %v498
      %515 = vst [vmem:[#allocation3 + $0x38] sm:$0xff] %v499
      %516 = vst [vmem:[#allocation3 + $0x40] sm:$0xff] %v500
      %517 = vst [vmem:[#allocation3 + $0x48] sm:$0xff] %v501
      %518 = vst [vmem:[#allocation3 + $0x50] sm:$0xff] %v502
      %519 = vst [vmem:[#allocation3 + $0x58] sm:$0xff] %v503
      %520 = vst [vmem:[#allocation3 + $0x60] sm:$0xff] %v504
      %521 = vst [vmem:[#allocation3 + $0x68] sm:$0xff] %v505
      %522 = vst [vmem:[#allocation3 + $0x70] sm:$0xff] %v506
      %523 = vst [vmem:[#allocation3 + $0x78] sm:$0xff] %v507
    $region25: #{tpu_custom_call.1} parent=1 // pred_fallthru
      _
    // Predicated region
    $region26: #{tpu_custom_call.1} parent=1 // pred_check
      _
    $region27: #{tpu_custom_call.1} parent=1 // pred_check_branch
      %525 = sbr.rel (0) target = $region29
    $region28: #{tpu_custom_call.1} parent=1 // pred_region
      %s527 = ssub.s32 2048, 2048
      %528 = vsyncadd [#allocation4], %s527
      %s529 = sshll.u32 [#allocation3], 4
      %s530 = int_to_ptr.vmem [resolvable:$true] %s529
      %535 = dma.vmem_to_hbm [thread:$0]  %s530, 2048, %s4, [#allocation4], 128, 128, 8
    $region29: #{tpu_custom_call.1} parent=1 // pred_fallthru
      _
    // Predicated region
    $region30: #{tpu_custom_call.1} parent=1 // pred_check
      _
    $region31: #{tpu_custom_call.1} parent=1 // pred_check_branch
      %537 = sbr.rel (0) target = $region33
    $region32: #{tpu_custom_call.1} parent=1 // pred_region
      %538 = dma.done [#allocation4], 2048
    $region33: #{tpu_custom_call.1} parent=1 // pred_fallthru
      _
    %539 = vsyncpa [#allocation4], 1

</llo_original>
